<compile_context>
chip_gen: v6e
topology: v6e:2x2x1
jax: 0.10.0
libtpu: 0.0.40
codegen_flags: <defaults>
</compile_context>

<pallas_src>
import jax
import jax.numpy as jnp
from jax.experimental import pallas as pl
from jax.experimental.pallas import tpu as pltpu


_LANE = 128
_SUBLANE = 8
# ~8 MiB logical block.  Double-buffered input + output => ~32 MiB resident.
_TARGET_BLOCK_BYTES = 8 * 1024 * 1024
# 48 MiB scoped VMEM: covers the 32 MiB resident footprint with headroom and
# stays under v7x's 64 MiB physical VMEM (v5e/v6e have 128 MiB physical).
_VMEM_LIMIT_BYTES = 48 * 1024 * 1024


def _copy_kernel(x_ref, o_ref):
    # Identity: load the whole current tile, store it back out.
    o_ref[...] = x_ref[...]


def _round_up(x, m):
    return ((x + m - 1) // m) * m


def _sublane_unit(itemsize):
    # Native sublane packing: f32 -> 8, bf16 -> 16, int8/fp8 -> 32.
    return _SUBLANE * max(1, 4 // max(1, itemsize))


def _choose_2d_view(total):
    """Pick a lane-dense (M, N) 2D view of the flat data."""
    if total % _LANE == 0:
        # Fully lane-aligned: every store is an unmasked 128-lane vst and each
        # row-range block is a contiguous HBM slab.
        return total // _LANE, _LANE
    # Unaligned element count: single-row view.  The lane axis is tiled in
    # 128-multiples below, so only the final block has masked lanes.
    return 1, total


def _choose_tiles(M, N, itemsize):
    """Pick (tile_m, tile_n) so the *padded* VMEM block is ~_TARGET_BLOCK_BYTES."""
    sub = _sublane_unit(itemsize)
    padded_n = _round_up(N, _LANE)
    if padded_n * itemsize * sub <= _TARGET_BLOCK_BYTES:
        # Rows are cheap: keep the full lane axis, tile rows only.
        tile_n = N
        rows = _TARGET_BLOCK_BYTES // (padded_n * itemsize)
        tile_m = max(sub, (rows // sub) * sub)
        if tile_m >= M:
            tile_m = M                      # full dim: always a legal extent
    else:
        # Even a minimal row-group exceeds the target (huge / unaligned rows):
        # tile the lane axis too so the padded block cannot VMEM-OOM.
        tile_m = M if M < sub else sub
        padded_m = _round_up(tile_m, sub)
        tile_n = max(
            _LANE,
            (_TARGET_BLOCK_BYTES // (padded_m * itemsize) // _LANE) * _LANE,
        )
        if tile_n >= N:
            tile_n = N
    return tile_m, tile_n


def _pallas_identity_copy(x2d):
    """Tiled, software-pipelined identity copy of a 2D array through VMEM."""
    M, N = x2d.shape
    itemsize = jnp.dtype(x2d.dtype).itemsize
    tile_m, tile_n = _choose_tiles(M, N, itemsize)
    grid = (pl.cdiv(M, tile_m), pl.cdiv(N, tile_n))

    return pl.pallas_call(
        _copy_kernel,
        out_shape=jax.ShapeDtypeStruct((M, N), x2d.dtype),
        grid=grid,
        in_specs=[pl.BlockSpec((tile_m, tile_n), lambda i, j: (i, j))],
        out_specs=pl.BlockSpec((tile_m, tile_n), lambda i, j: (i, j)),
        compiler_params=pltpu.CompilerParams(
            # Each grid point owns a disjoint output tile -> both axes are
            # truly parallel; lets v7x shard the copy across its 2 TensorCores
            # (no-op on single-TC v5e/v6e).
            dimension_semantics=("parallel", "parallel"),
            vmem_limit_bytes=_VMEM_LIMIT_BYTES,
        ),
    )(x2d)


def unsqueeze(x, dim):
    """Equivalent of torch.Tensor.unsqueeze(dim), with the data path in Pallas."""
    ndim = x.ndim
    # torch.unsqueeze dim convention: valid range is [-ndim-1, ndim]
    if not (-(ndim + 1) <= dim <= ndim):
        raise ValueError(f"dim {dim} out of range for ndim {ndim}")
    if dim < 0:
        dim = dim + ndim + 1
    out_shape = x.shape[:dim] + (1,) + x.shape[dim:]

    # Empty tensors: nothing to copy, axis insertion is pure metadata.
    if x.size == 0:
        return jnp.reshape(x, out_shape)

    M, N = _choose_2d_view(x.size)
    y2d = _pallas_identity_copy(jnp.reshape(x, (M, N)))
    # Inserting the size-1 axis is a free reshape.
    return jnp.reshape(y2d, out_shape)


class Unsqueeze:
    """Mirror of the PyTorch module (no parameters)."""

    def __init__(self, dim):
        self.dim = dim

    def __call__(self, x):
        return unsqueeze(x, self.dim)


if __name__ == "__main__":
    key = jax.random.PRNGKey(0)
    # Small NCHW-style input consistent with typical usage of this module.
    x = jax.random.normal(key, (2, 4, 16, 16), dtype=jnp.float32)

    # dim = 1 (positive)
    y = jax.block_until_ready(Unsqueeze(1)(x))
    ref = jnp.expand_dims(x, 1)
    assert y.shape == (2, 1, 4, 16, 16), y.shape
    assert y.dtype == x.dtype
    assert bool(jnp.array_equal(y, ref))

    # Negative dim, matching torch semantics.
    y_neg = jax.block_until_ready(Unsqueeze(-1)(x))
    assert y_neg.shape == (2, 4, 16, 16, 1), y_neg.shape
    assert bool(jnp.array_equal(y_neg, jnp.expand_dims(x, -1)))

    # dim = 0 and a non-128-aligned element count (exercises the (1, total) view).
    x2 = jax.random.normal(jax.random.PRNGKey(1), (3, 5, 7), dtype=jnp.float32)
    y2 = jax.block_until_ready(Unsqueeze(0)(x2))
    assert y2.shape == (1, 3, 5, 7), y2.shape
    assert bool(jnp.array_equal(y2, jnp.expand_dims(x2, 0)))

    # bf16, lane-aligned count (exercises the (total/128, 128) view + packing).
    x3 = jax.random.normal(jax.random.PRNGKey(2), (4, 8, 32), dtype=jnp.bfloat16)
    y3 = jax.block_until_ready(Unsqueeze(2)(x3))
    assert y3.shape == (4, 8, 1, 32), y3.shape
    assert bool(jnp.array_equal(y3, jnp.expand_dims(x3, 2)))

    # Empty tensor (metadata-only path).
    x4 = jnp.zeros((2, 0, 4), dtype=jnp.float32)
    y4 = Unsqueeze(2)(x4)
    assert y4.shape == (2, 0, 1, 4), y4.shape

    print("KERNEL_OK")
</pallas_src>

<mosaic_0001>
module attributes {stable_mosaic.version = 11 : i64} {
  func.func @_copy_kernel(%arg0: i32, %arg1: i32, %arg2: memref<16x128xf32, #tpu.memory_space<vmem>>, %arg3: memref<16x128xf32, #tpu.memory_space<vmem>>) attributes {dimension_semantics = [#tpu.dimension_semantics<parallel>, #tpu.dimension_semantics<parallel>], iteration_bounds = array<i64: 1, 1>, scalar_prefetch = 0 : i64, scratch_operands = 0 : i64, tpu.core_type = #tpu.core_type<tc>, window_params = [{transform_indices = @transform_0, window_bounds = array<i64: 16, 128>}, {transform_indices = @transform_1, window_bounds = array<i64: 16, 128>}]} {
    %c0 = arith.constant 0 : index
    %c0_0 = arith.constant 0 : index
    %0 = vector.load %arg2[%c0, %c0_0] : memref<16x128xf32, #tpu.memory_space<vmem>>, vector<16x128xf32>
    %c0_1 = arith.constant 0 : index
    %c0_2 = arith.constant 0 : index
    %1 = vector.load %arg3[%c0_1, %c0_2] : memref<16x128xf32, #tpu.memory_space<vmem>>, vector<16x128xf32>
    tpu.vector_store %arg3[%c0_1, %c0_2], %0 {strides = array<i32>} : memref<16x128xf32, #tpu.memory_space<vmem>>, vector<16x128xf32>,
    return
  }
  func.func @transform_0(%arg0: i32, %arg1: i32) -> (i32, i32) {
    %c0_i32 = arith.constant 0 : i32
    return %arg0, %arg1 : i32, i32
  }
  func.func @transform_1(%arg0: i32, %arg1: i32) -> (i32, i32) {
    %c0_i32 = arith.constant 0 : i32
    return %arg0, %arg1 : i32, i32
  }
}

</mosaic_0001>

<llo_original>
// kernel: tpu_custom_call.1
$region0: #{tpu_custom_call.1}
  #allocation0 [shape = 'u32[]', space=smem, size = 0x4, offset = 0x4, fixed_abs, tag = 'smem constant byte address 0x4 - core index']
  #allocation1 [shape = 'u32[144,128]{1,0:T(1,128)}', space=vmem, size = 0x12000, scoped, tag = 'internal scratch']
  %s0 = inlined_call_operand.hbm [shape: f32[16,128], index: 0, kind: input, shape index: {}]
  %s1 = inlined_call_operand.hbm [shape: f32[16,128], index: 1, kind: output, shape index: {}]
  %s2 = sld [smem:[#allocation0]]
  $region18: #{tpu_custom_call.1} parent=0
    _
  %s4 = ssub.s32 1, %s2
  %s5 = scalar_select 0, %s4, %s2
  $region1: #{tpu_custom_call.1} parent=0
    #allocation2 [shape = 'u8[8192]{0}', space=vmem, size = 0x2000, scoped, tag = 'input window, operand 0, single buffered']
    #allocation3 [shape = 's32[1]{0}', space=sflag, size = 0x4, scoped, tag = 'scoped memory for tpu_custom_call.1']
    #allocation4 [shape = 's32[1]{0}', space=sflag, size = 0x4, scoped, tag = 'scoped memory for tpu_custom_call.1']
    #allocation5 [shape = 'u8[8192]{0}', space=vmem, size = 0x2000, scoped, tag = 'output window, operand 0, single buffered']
    %6 = vsyncpa [#allocation3], 0
    %7 = vsyncpa [#allocation4], 0
    // Predicated region
    $region2: #{tpu_custom_call.1} parent=1 // pred_check
      _
    $region3: #{tpu_custom_call.1} parent=1 // pred_check_branch
      %9 = sbr.rel (0) target = $region5
    $region4: #{tpu_custom_call.1} parent=1 // pred_region
      %s11 = ssub.s32 256, 256
      %12 = vsyncadd [#allocation3], %s11
      %s13 = sshll.u32 [#allocation2], 4
      %s14 = int_to_ptr.vmem [resolvable:$true] %s13
      %19 = dma.hbm_to_vmem [thread:$0]  %s0, 256, %s14, [#allocation3], 128, 128, 8
    $region5: #{tpu_custom_call.1} parent=1 // pred_fallthru
      _
    // Predicated region
    $region6: #{tpu_custom_call.1} parent=1 // pred_check
      _
    $region7: #{tpu_custom_call.1} parent=1 // pred_check_branch
      %21 = sbr.rel (0) target = $region9
    $region8: #{tpu_custom_call.1} parent=1 // pred_region
      %22 = dma.done [#allocation3], 256
    $region9: #{tpu_custom_call.1} parent=1 // pred_fallthru
      _
    %v23 = vld [vmem:[#allocation2] sm:$0xff]
    %v24 = vld [vmem:[#allocation2 + $0x8] sm:$0xff]
    %25 = vst [vmem:[#allocation5] sm:$0xff] %v23
    %26 = vst [vmem:[#allocation5 + $0x8] sm:$0xff] %v24
    // Predicated region
    $region10: #{tpu_custom_call.1} parent=1 // pred_check
      _
    $region11: #{tpu_custom_call.1} parent=1 // pred_check_branch
      %28 = sbr.rel (0) target = $region13
    $region12: #{tpu_custom_call.1} parent=1 // pred_region
      %s30 = ssub.s32 256, 256
      %31 = vsyncadd [#allocation4], %s30
      %s32 = sshll.u32 [#allocation5], 4
      %s33 = int_to_ptr.vmem [resolvable:$true] %s32
      %38 = dma.vmem_to_hbm [thread:$0]  %s33, 256, %s1, [#allocation4], 128, 128, 8
    $region13: #{tpu_custom_call.1} parent=1 // pred_fallthru
      _
    // Predicated region
    $region14: #{tpu_custom_call.1} parent=1 // pred_check
      _
    $region15: #{tpu_custom_call.1} parent=1 // pred_check_branch
      %40 = sbr.rel (0) target = $region17
    $region16: #{tpu_custom_call.1} parent=1 // pred_region
      %41 = dma.done [#allocation4], 256
    $region17: #{tpu_custom_call.1} parent=1 // pred_fallthru
      _
    %42 = vsyncpa [#allocation3], 1
    %43 = vsyncpa [#allocation4], 1

</llo_original>
